<compile_context>
chip_gen: v7x
topology: tpu7x:2x2x1
jax: 0.10.0
libtpu: 0.0.40
codegen_flags: <defaults>
</compile_context>

<pallas_src>
import functools

import jax
import jax.numpy as jnp
from jax.experimental import pallas as pl
from jax.experimental.pallas import tpu as pltpu

_LANES = 128


def _contrastive_kernel(x_ref, w_ref, b_ref, labels_ref,
                        preds_ref, loss_ref, *, batch_size, tile_b):
    # x_ref: (tile_b, H) last-timestep embeddings, native dtype (e.g. bf16/f32).
    # w_ref: (1, H) weight in the same dtype; MXU takes bf16 in / f32 acc natively.
    logits = jax.lax.dot_general(
        w_ref[...], x_ref[...], (((1,), (1,)), ((), ())),
        preferred_element_type=jnp.float32)                 # (1, tile_b), lane-dense
    logits = logits + b_ref[0, 0]                           # bias scalar from SMEM

    preds = jax.nn.sigmoid(logits)                          # (1, tile_b)  (EUP)
    preds_ref[...] = preds.astype(preds_ref.dtype)

    # nn.BCELoss per-element terms (PyTorch clamps the log terms at -100).
    labels = labels_ref[...].astype(jnp.float32)            # (1, tile_b)
    log_p = jnp.maximum(jnp.log(preds), -100.0)
    log_1mp = jnp.maximum(jnp.log1p(-preds), -100.0)
    per_elem = -(labels * log_p + (1.0 - labels) * log_1mp)

    # Mask rows past the true batch size (last tile may be padded), then reduce
    # this tile to a single partial sum (cross-lane reduce rides the idle XLU).
    col = pl.program_id(0) * tile_b + jax.lax.broadcasted_iota(
        jnp.int32, (1, tile_b), 1)
    partial = jnp.sum(jnp.where(col < batch_size, per_elem, 0.0))

    # Store the partial in lane 0 of this tile's (1, 128) output block.
    lane = jax.lax.broadcasted_iota(jnp.int32, (1, _LANES), 1)
    loss_ref[...] = jnp.where(lane == 0, partial, 0.0).astype(loss_ref.dtype)


def _choose_tile_b(B, H, dtype_bytes):
    """Pick a batch tile: VMEM-budget driven, multiple of 128 (or the full batch)."""
    budget = 12 * 1024 * 1024                 # for the double-buffered embeds block
    cap = budget // (2 * H * dtype_bytes)
    if cap >= B:
        tile = B                              # single full-extent tile
    else:
        tile = max(_LANES, (min(cap, 4096) // _LANES) * _LANES)
    # Keep the grid length >= 2 for large batches (v7x: 2 TensorCores).
    if B > 2 * _LANES:
        tile = min(tile, _LANES * ((B + 2 * _LANES - 1) // (2 * _LANES)))
    return max(1, min(tile, B))


def contrastive_learn_forward(embeds, labels, weight, bias):
    """ContrastiveLearn forward (post-encoder part).

    embeds: (B, S, H) float array (any float dtype)
    labels: (B,)  in {0, 1}
    weight: nn.Linear(H, 1) weight, any shape with H elements (e.g. (1, H))
    bias:   nn.Linear bias, 1 element
    """
    B, S, H = embeds.shape
    dtype_bytes = jnp.dtype(embeds.dtype).itemsize
    tile_b = _choose_tile_b(B, H, dtype_bytes)
    n_tiles = pl.cdiv(B, tile_b)
    grid = (n_tiles,)

    # Contiguous last-timestep slab; XLA can fuse this slice into the encoder.
    x_last = embeds[:, -1, :]                                        # (B, H)
    w_row = jnp.reshape(weight, (1, H)).astype(embeds.dtype)         # native dtype
    b_smem = jnp.reshape(bias, (1, 1)).astype(jnp.float32)
    labels_row = jnp.reshape(labels, (1, B)).astype(jnp.float32)     # lane-dense

    kernel = functools.partial(_contrastive_kernel, batch_size=B, tile_b=tile_b)

    preds_row, loss_partials = pl.pallas_call(
        kernel,
        grid=grid,
        in_specs=[
            pl.BlockSpec((tile_b, H), lambda i: (i, 0)),              # last-step embeds
            pl.BlockSpec((1, H), lambda i: (0, 0)),                   # weight
            pl.BlockSpec(memory_space=pltpu.MemorySpace.SMEM),        # bias scalar
            pl.BlockSpec((1, tile_b), lambda i: (0, i)),              # labels (lane-dense)
        ],
        out_specs=(
            pl.BlockSpec((1, tile_b), lambda i: (0, i)),              # preds (lane-dense)
            pl.BlockSpec((1, _LANES), lambda i: (0, i)),              # per-tile BCE partial
        ),
        out_shape=(
            jax.ShapeDtypeStruct((1, B), jnp.float32),
            jax.ShapeDtypeStruct((1, n_tiles * _LANES), jnp.float32),
        ),
        compiler_params=pltpu.CompilerParams(
            dimension_semantics=("parallel",),          # both TCs usable on v7x
            vmem_limit_bytes=32 * 1024 * 1024,          # safe on v5e/v6e/v7x
        ),
    )(x_last, w_row, b_smem, labels_row)

    # BCELoss mean reduction over the (already masked) per-tile partials.
    loss = jnp.sum(loss_partials) / jnp.float32(B)
    return {
        "loss": loss,
        "preds": preds_row.reshape(B, 1),
        "labels": labels_row.reshape(B, 1),
    }


if __name__ == "__main__":
    B, S, H = 8, 8, 32   # batch, seq len, clmbr config['size']

    key = jax.random.PRNGKey(0)
    k_emb, k_lab, k_w, k_b = jax.random.split(key, 4)

    # Synthetic "timeline_model" outputs.
    embeds = jax.random.normal(k_emb, (B, S, H), dtype=jnp.float32)
    labels = jax.random.bernoulli(k_lab, 0.5, (B,)).astype(jnp.float32)

    # MLPLayer = nn.Linear(H, 1): PyTorch weight layout is (1, H),
    # default init U(-1/sqrt(H), 1/sqrt(H)).
    bound = 1.0 / jnp.sqrt(jnp.float32(H))
    weight = jax.random.uniform(k_w, (1, H), minval=-bound, maxval=bound, dtype=jnp.float32)
    bias = jax.random.uniform(k_b, (1,), minval=-bound, maxval=bound, dtype=jnp.float32)

    out = contrastive_learn_forward(embeds, labels, weight, bias)
    jax.block_until_ready(out["loss"])
    jax.block_until_ready(out["preds"])

    # Pure-JAX reference check of the forward semantics.
    x_last = embeds[:, -1, :]
    preds_ref = jax.nn.sigmoid(x_last @ weight.T + bias)          # (B, 1)
    loss_ref = jnp.mean(
        -(labels[:, None] * jnp.maximum(jnp.log(preds_ref), -100.0)
          + (1.0 - labels[:, None]) * jnp.maximum(jnp.log1p(-preds_ref), -100.0)))
    assert jnp.allclose(out["preds"], preds_ref, atol=1e-5), "preds mismatch"
    assert jnp.allclose(out["loss"], loss_ref, atol=1e-5), "loss mismatch"

    print("KERNEL_OK")
</pallas_src>

<mosaic_0001>
module attributes {stable_mosaic.version = 11 : i64} {
  func.func @_contrastive_kernel(%arg0: i32, %arg1: memref<8x32xf32, #tpu.memory_space<vmem>>, %arg2: memref<1x32xf32, #tpu.memory_space<vmem>>, %arg3: memref<1x1xf32, #tpu.memory_space<smem>>, %arg4: memref<1x8xf32, #tpu.memory_space<vmem>>, %arg5: memref<1x8xf32, #tpu.memory_space<vmem>>, %arg6: memref<1x128xf32, #tpu.memory_space<vmem>>) attributes {dimension_semantics = [#tpu.dimension_semantics<parallel>], iteration_bounds = array<i64: 1>, scalar_prefetch = 0 : i64, scratch_operands = 0 : i64, tpu.core_type = #tpu.core_type<tc>, window_params = [{transform_indices = @transform_0, window_bounds = array<i64: 8, 32>}, {pipeline_mode = #tpu.pipeline_mode<synchronous>, transform_indices = @transform_1, window_bounds = array<i64: 1, 32>}, {transform_indices = @transform_2, window_bounds = array<i64: 1, 1>}, {transform_indices = @transform_3, window_bounds = array<i64: 1, 8>}, {transform_indices = @transform_4, window_bounds = array<i64: 1, 8>}, {transform_indices = @transform_5, window_bounds = array<i64: 1, 128>}]} {
    %c0 = arith.constant 0 : index
    %c0_0 = arith.constant 0 : index
    %0 = vector.load %arg2[%c0, %c0_0] : memref<1x32xf32, #tpu.memory_space<vmem>>, vector<1x32xf32>
    %c0_1 = arith.constant 0 : index
    %c0_2 = arith.constant 0 : index
    %1 = vector.load %arg1[%c0_1, %c0_2] : memref<8x32xf32, #tpu.memory_space<vmem>>, vector<8x32xf32>
    %cst = arith.constant dense<0.000000e+00> : vector<1x8xf32>
    %2 = tpu.matmul %0, %1, %cst {dimension_numbers = #tpu.dot_dimension_numbers<[1], [1], [0], [0], [0, 0, 1, 0], [], []>} : vector<1x32xf32>, vector<8x32xf32>, vector<1x8xf32> -> vector<1x8xf32>
    %c0_3 = arith.constant 0 : index
    %c0_4 = arith.constant 0 : index
    %3 = memref.load %arg3[%c0_3, %c0_4] : memref<1x1xf32, #tpu.memory_space<smem>>
    %4 = vector.broadcast %3 : f32 to vector<1x8xf32>
    %5 = arith.addf %2, %4 : vector<1x8xf32>
    %6 = arith.negf %5 : vector<1x8xf32>
    %7 = math.exp %6 : vector<1x8xf32>
    %cst_5 = arith.constant 1.000000e+00 : f32
    %8 = vector.broadcast %cst_5 : f32 to vector<1x8xf32>
    %9 = arith.addf %8, %7 : vector<1x8xf32>
    %10 = arith.divf %8, %9 : vector<1x8xf32>
    %c0_6 = arith.constant 0 : index
    %c0_7 = arith.constant 0 : index
    %11 = vector.load %arg5[%c0_6, %c0_7] : memref<1x8xf32, #tpu.memory_space<vmem>>, vector<1x8xf32>
    tpu.vector_store %arg5[%c0_6, %c0_7], %10 {strides = array<i32>} : memref<1x8xf32, #tpu.memory_space<vmem>>, vector<1x8xf32>,
    %c0_8 = arith.constant 0 : index
    %c0_9 = arith.constant 0 : index
    %12 = vector.load %arg4[%c0_8, %c0_9] : memref<1x8xf32, #tpu.memory_space<vmem>>, vector<1x8xf32>
    %13 = math.log %10 : vector<1x8xf32>
    %cst_10 = arith.constant -1.000000e+02 : f32
    %14 = vector.broadcast %cst_10 : f32 to vector<1x8xf32>
    %15 = arith.maximumf %13, %14 : vector<1x8xf32>
    %cst_11 = arith.constant 0.000000e+00 : f32
    %16 = vector.broadcast %cst_11 : f32 to vector<1x8xf32>
    %17 = arith.subf %16, %10 : vector<1x8xf32>
    %18 = math.log1p %17 : vector<1x8xf32>
    %cst_12 = arith.constant -1.000000e+02 : f32
    %19 = vector.broadcast %cst_12 : f32 to vector<1x8xf32>
    %20 = arith.maximumf %18, %19 : vector<1x8xf32>
    %21 = arith.mulf %12, %15 : vector<1x8xf32>
    %cst_13 = arith.constant 1.000000e+00 : f32
    %22 = vector.broadcast %cst_13 : f32 to vector<1x8xf32>
    %23 = arith.subf %22, %12 : vector<1x8xf32>
    %24 = arith.mulf %23, %20 : vector<1x8xf32>
    %25 = arith.addf %21, %24 : vector<1x8xf32>
    %cst_14 = arith.constant 0.000000e+00 : f32
    %26 = vector.broadcast %cst_14 : f32 to vector<1x8xf32>
    %27 = arith.subf %26, %25 : vector<1x8xf32>
    %c8_i32 = arith.constant 8 : i32
    %28 = arith.muli %arg0, %c8_i32 : i32
    %29 = tpu.iota {dimensions = array<i32: 1>} : vector<1x8xi32>
    %30 = vector.broadcast %28 : i32 to vector<1x8xi32>
    %31 = arith.addi %30, %29 : vector<1x8xi32>
    %c8_i32_15 = arith.constant 8 : i32
    %32 = vector.broadcast %c8_i32_15 : i32 to vector<1x8xi32>
    %33 = arith.cmpi slt, %31, %32 : vector<1x8xi32>
    %cst_16 = arith.constant 0.000000e+00 : f32
    %34 = vector.broadcast %cst_16 : f32 to vector<1x8xf32>
    %35 = arith.select %33, %27, %34 : vector<1x8xi1>, vector<1x8xf32>
    %36 = vector.shape_cast %35 : vector<1x8xf32> to vector<1x1x8xf32>
    %cst_17 = arith.constant dense<0.000000e+00> : vector<1xf32>
    %37 = vector.multi_reduction <add>, %36, %cst_17 [1, 2] : vector<1x1x8xf32> to vector<1xf32>
    %38 = vector.shape_cast %37 : vector<1xf32> to vector<1x1x1xf32>
    %39 = vector.extract %38[0, 0, 0] : f32 from vector<1x1x1xf32>
    %40 = tpu.iota {dimensions = array<i32: 1>} : vector<1x128xi32>
    %c0_i32 = arith.constant 0 : i32
    %41 = vector.broadcast %c0_i32 : i32 to vector<1x128xi32>
    %42 = arith.cmpi eq, %40, %41 : vector<1x128xi32>
    %cst_18 = arith.constant 0.000000e+00 : f32
    %43 = vector.broadcast %39 : f32 to vector<1x128xf32>
    %44 = vector.broadcast %cst_18 : f32 to vector<1x128xf32>
    %45 = arith.select %42, %43, %44 : vector<1x128xi1>, vector<1x128xf32>
    %c0_19 = arith.constant 0 : index
    %c0_20 = arith.constant 0 : index
    %46 = vector.load %arg6[%c0_19, %c0_20] : memref<1x128xf32, #tpu.memory_space<vmem>>, vector<1x128xf32>
    tpu.vector_store %arg6[%c0_19, %c0_20], %45 {strides = array<i32>} : memref<1x128xf32, #tpu.memory_space<vmem>>, vector<1x128xf32>,
    return
  }
  func.func @transform_0(%arg0: i32) -> (i32, i32) {
    %c0_i32 = arith.constant 0 : i32
    %c0_i32_0 = arith.constant 0 : i32
    return %arg0, %c0_i32 : i32, i32
  }
  func.func @transform_1(%arg0: i32) -> (i32, i32) {
    %c0_i32 = arith.constant 0 : i32
    %c0_i32_0 = arith.constant 0 : i32
    %c0_i32_1 = arith.constant 0 : i32
    return %c0_i32, %c0_i32_0 : i32, i32
  }
  func.func @transform_2(%arg0: i32) -> (i32, i32) {
    %c0_i32 = arith.constant 0 : i32
    %c0_i32_0 = arith.constant 0 : i32
    %c0_i32_1 = arith.constant 0 : i32
    return %c0_i32, %c0_i32_0 : i32, i32
  }
  func.func @transform_3(%arg0: i32) -> (i32, i32) {
    %c0_i32 = arith.constant 0 : i32
    %c0_i32_0 = arith.constant 0 : i32
    return %c0_i32, %arg0 : i32, i32
  }
  func.func @transform_4(%arg0: i32) -> (i32, i32) {
    %c0_i32 = arith.constant 0 : i32
    %c0_i32_0 = arith.constant 0 : i32
    return %c0_i32, %arg0 : i32, i32
  }
  func.func @transform_5(%arg0: i32) -> (i32, i32) {
    %c0_i32 = arith.constant 0 : i32
    %c0_i32_0 = arith.constant 0 : i32
    return %c0_i32, %arg0 : i32, i32
  }
}

</mosaic_0001>

<llo_original>
// kernel: tpu_custom_call.1
$region0: #{tpu_custom_call.1}
  #allocation0 [shape = 'u32[]', space=smem, size = 0x4, offset = 0x4, fixed_abs, tag = 'smem constant byte address 0x4 - core index']
  #allocation1 [shape = 'u32[144,128]{1,0:T(1,128)}', space=vmem, size = 0x12000, scoped, tag = 'internal scratch']
  #allocation2 [shape = 'f32[1,1]{1,0:T(1,128)S(6)}', space=smem, size = 0x200, scoped, tag = 'scoped memory for tpu_custom_call.1']
  %s0 = inlined_call_operand.hbm [shape: f32[8,32], index: 0, kind: input, shape index: {}]
  %s1 = inlined_call_operand.vmem [shape: f32[1,32], index: 1, kind: input, shape index: {}]
  %s2 = inlined_call_operand.<no memory space> [shape: f32[1,1], index: 2, kind: input, shape index: {}]
  %s3 = inlined_call_operand.vmem [shape: f32[1,8], index: 3, kind: input, shape index: {}]
  %s4 = inlined_call_operand.hbm [shape: f32[1,8], index: 4, kind: output, shape index: {0}]
  %s5 = inlined_call_operand.hbm [shape: f32[1,128], index: 5, kind: output, shape index: {1}]
  %6 = xla_tuple %s4, %s5
  %s7 = sld [smem:[#allocation0]]
  $region38: #{tpu_custom_call.1} parent=0
    _
  %s9 = ssub.s32 1, %s7
  %s10 = scalar_select 0, %s9, %s7
  %11 = sst [smem:[#allocation2]] %s2
  $region1: #{tpu_custom_call.1} parent=0
    #allocation3 [shape = 'u8[4096]{0}', space=vmem, size = 0x1000, scoped, tag = 'input window, operand 0, single buffered']
    #allocation4 [shape = 's32[1]{0}', space=sflag, size = 0x4, scoped, tag = 'scoped memory for tpu_custom_call.1']
    #allocation5 [shape = 's32[1]{0}', space=sflag, size = 0x4, scoped, tag = 'scoped memory for tpu_custom_call.1']
    #allocation6 [shape = 'u8[512]{0}', space=vmem, size = 0x400, scoped, tag = 'output window, operand 0, single buffered']
    #allocation7 [shape = 'u8[512]{0}', space=vmem, size = 0x400, scoped, tag = 'output window, operand 1, single buffered']
    #allocation8 [shape = 's32[1]{0}', space=sflag, size = 0x4, scoped, tag = 'scoped memory for tpu_custom_call.1']
    %12 = vsyncpa [#allocation4], 0
    %13 = vsyncpa [#allocation5], 0
    %14 = vsyncpa [#allocation8], 0
    // Predicated region
    $region2: #{tpu_custom_call.1} parent=1 // pred_check
      _
    $region3: #{tpu_custom_call.1} parent=1 // pred_check_branch
      %16 = sbr.rel (0) target = $region5
    $region4: #{tpu_custom_call.1} parent=1 // pred_region
      %s18 = ssub.s32 128, 128
      %19 = vsyncadd [#allocation4], %s18
      %s21 = sshll.u32 [#allocation3], 4
      %s22 = int_to_ptr.vmem [resolvable:$true] %s21
      %24 = dma.hbm_to_vmem [thread:$0]  %s0, 128, %s22, [#allocation4]
    $region5: #{tpu_custom_call.1} parent=1 // pred_fallthru
      _
    // Predicated region
    $region6: #{tpu_custom_call.1} parent=1 // pred_check
      _
    $region7: #{tpu_custom_call.1} parent=1 // pred_check_branch
      %26 = sbr.rel (0) target = $region9
    $region8: #{tpu_custom_call.1} parent=1 // pred_region
      _
    $region9: #{tpu_custom_call.1} parent=1 // pred_fallthru
      _
    // Predicated region
    $region10: #{tpu_custom_call.1} parent=1 // pred_check
      _
    $region11: #{tpu_custom_call.1} parent=1 // pred_check_branch
      %28 = sbr.rel (0) target = $region13
    $region12: #{tpu_custom_call.1} parent=1 // pred_region
      _
    $region13: #{tpu_custom_call.1} parent=1 // pred_fallthru
      _
    // Predicated region
    $region14: #{tpu_custom_call.1} parent=1 // pred_check
      _
    $region15: #{tpu_custom_call.1} parent=1 // pred_check_branch
      %30 = sbr.rel (0) target = $region17
    $region16: #{tpu_custom_call.1} parent=1 // pred_region
      _
    $region17: #{tpu_custom_call.1} parent=1 // pred_fallthru
      _
    // Predicated region
    $region18: #{tpu_custom_call.1} parent=1 // pred_check
      _
    $region19: #{tpu_custom_call.1} parent=1 // pred_check_branch
      %32 = sbr.rel (0) target = $region21
    $region20: #{tpu_custom_call.1} parent=1 // pred_region
      %33 = dma.done [#allocation4], 128
    $region21: #{tpu_custom_call.1} parent=1 // pred_fallthru
      _
    %v34 = vld [vmem:[%s1] sm:$0x1]
    %v35 = vld [vmem:[#allocation3] sm:$0xff]
    %s36 = sld [smem:[#allocation2]]
    %v37 = vstv %s36
    %vm38 = vcmask 261120
    %v40 = vsel %vm38, %v34, 0
    %v43 = vsel %vm38, %v35, 0
    %45 = vmatprep.subr.mxu0 0.0
    %46 = vmatpush1.xpose.msra.mxu0 %v43
    %47 = vmatprep.subr.mxu0 0.0
    %48 = vmatpush1.xpose.msra.mxu0 0.0
    %49 = vmatprep.subr.mxu0 0.0
    %50 = vmatpush1.xpose.msra.mxu0 0.0
    %51 = vmatprep.subr.mxu0 0.0
    %52 = vmatpush1.xpose.msra.mxu0 0.0
    %53 = vmatprep.subr.mxu0 0.0
    %54 = vmatpush1.xpose.msra.mxu0 0.0
    %55 = vmatprep.subr.mxu0 0.0
    %56 = vmatpush1.xpose.msra.mxu0 0.0
    %57 = vmatprep.subr.mxu0 0.0
    %58 = vmatpush1.xpose.msra.mxu0 0.0
    %59 = vmatprep.subr.mxu0 0.0
    %60 = vmatpush1.xpose.msra.mxu0 0.0
    %61 = vmatprep.subr.mxu0 0.0
    %62 = vmatpush1.xpose.msra.mxu0 0.0
    %63 = vmatprep.subr.mxu0 0.0
    %64 = vmatpush1.xpose.msra.mxu0 0.0
    %65 = vmatprep.subr.mxu0 0.0
    %66 = vmatpush1.xpose.msra.mxu0 0.0
    %67 = vmatprep.subr.mxu0 0.0
    %68 = vmatpush1.xpose.msra.mxu0 0.0
    %69 = vmatprep.subr.mxu0 0.0
    %70 = vmatpush1.xpose.msra.mxu0 0.0
    %71 = vmatprep.subr.mxu0 0.0
    %72 = vmatpush1.xpose.msra.mxu0 0.0
    %73 = vmatprep.subr.mxu0 0.0
    %74 = vmatpush1.xpose.msra.mxu0 0.0
    %75 = vmatprep.subr.mxu0 0.0
    %76 = vmatpush1.xpose.msra.mxu0 0.0
    %77 = vmatprep.subr.mxu0 0.0
    %78 = vmatpush1.xpose.msra.mxu0 0.0
    %79 = vmatprep.subr.mxu0 0.0
    %80 = vmatpush1.xpose.msra.mxu0 0.0
    %81 = vmatprep.subr.mxu0 0.0
    %82 = vmatpush1.xpose.msra.mxu0 0.0
    %83 = vmatprep.subr.mxu0 0.0
    %84 = vmatpush1.xpose.msra.mxu0 0.0
    %85 = vmatprep.subr.mxu0 0.0
    %86 = vmatpush1.xpose.msra.mxu0 0.0
    %87 = vmatprep.subr.mxu0 0.0
    %88 = vmatpush1.xpose.msra.mxu0 0.0
    %89 = vmatprep.subr.mxu0 0.0
    %90 = vmatpush1.xpose.msra.mxu0 0.0
    %91 = vmatprep.subr.mxu0 0.0
    %92 = vmatpush1.xpose.msra.mxu0 0.0
    %93 = vmatprep.subr.mxu0 0.0
    %94 = vmatpush1.xpose.msra.mxu0 0.0
    %95 = vmatprep.subr.mxu0 0.0
    %96 = vmatpush1.xpose.msra.mxu0 0.0
    %97 = vmatprep.subr.mxu0 0.0
    %98 = vmatpush1.xpose.msra.mxu0 0.0
    %99 = vmatprep.subr.mxu0 0.0
    %100 = vmatpush1.xpose.msra.mxu0 0.0
    %101 = vmatprep.subr.mxu0 0.0
    %102 = vmatpush1.xpose.msra.mxu0 0.0
    %103 = vmatprep.subr.mxu0 0.0
    %104 = vmatpush1.xpose.msra.mxu0 0.0
    %105 = vmatprep.subr.mxu0 0.0
    %106 = vmatpush1.xpose.msra.mxu0 0.0
    %107 = vmatprep.subr.mxu0 0.0
    %108 = vmatpush1.xpose.msra.mxu0 0.0
    %109 = vmatprep.mubr.f32.mxu0 0.0
    %110 = vmatmul.mubr.f32.gmra.mrb[0].mxu0 %v40
    %v111 = vpop.f32.mrb[0].mxu0
    %v112 = vadd.f32 %v37, %v111
    %v113 = vpop.f32.mrb[0].mxu0
    %114 = vdwg.mxu0
    %v115 = vxor.u32 %v112, 2147483648
    %v116 = vmul.f32 %v115, 1.442695
    %v117 = vpow.pop %v116
    %v118 = vadd.f32 %v117, 1.0
    %v119 = vrcp.pop %v118
    %v120 = vmul.f32 1.0, %v119
    %vm121 = vcmask 57344
    %122 = vst.msk [vmem:[#allocation6] sm:$0x1] %vm121, %v120
    %v123 = vld [vmem:[%s3] sm:$0x1]
    %v124 = vlog2.pop %v120
    %v125 = vmul.f32 %v124, 0.6931472
    %v126 = vmax.f32 %v125, -100.0
    %v127 = vsub.f32 0.0, %v120
    %v128 = vadd.f32 %v127, 1.0
    %v129 = vlog2.pop %v128
    %v130 = vmul.f32 %v129, 0.6931472
    %v131 = vmul.f32 -0.5, %v127
    %v132 = vadd.f32 %v131, 1.0
    %v133 = vmul.f32 %v132, %v127
    %v134 = vand.u32 2147483647, %v127
    %vm135 = vcmp.lt.f32.partialorder %v134, 0.0004427343
    %v136 = vsel %vm135, %v133, %v130
    %v137 = vmax.f32 %v136, -100.0
    %v138 = vmul.f32 %v123, %v126
    %v139 = vsub.f32 1.0, %v123
    %v140 = vmul.f32 %v139, %v137
    %v141 = vadd.f32 %v138, %v140
    %v142 = vsub.f32 0.0, %v141
    %s143 = smul.u32 0, 8
    %v144 = vlaneseq
    %v145 = vand.u32 %v144, 127
    %v146 = vstv %s143
    %v147 = vadd.s32 %v146, %v145
    %vm148 = vcmp.lt.s32.totalorder %v147, 8
    %v149 = vsel %vm148, %v142, 0.0
    %v150 = vsel %vm121, %v149, 0.0
    %151 = vadd.xlane.f32.xlu0 %v150
    %v152 = vpop.xlane.xlu0 %151
    %v153 = vrot.slane %v152, 4
    %v154 = vadd.f32 %v152, %v153
    %v155 = vrot.slane %v154, 2
    %v156 = vadd.f32 %v154, %v155
    %v157 = vrot.slane %v156, 1
    %v158 = vadd.f32 %v156, %v157
    %s159 = vtos %v158
    %vm160 = vcmp.eq.s32.totalorder %v145, 0
    %v161 = vstv %s159
    %v162 = vsel %vm160, %v161, 0.0
    %163 = vst [vmem:[#allocation7] sm:$0x1] %v162
    // Predicated region
    $region22: #{tpu_custom_call.1} parent=1 // pred_check
      _
    $region23: #{tpu_custom_call.1} parent=1 // pred_check_branch
      %165 = sbr.rel (0) target = $region25
    $region24: #{tpu_custom_call.1} parent=1 // pred_region
      %s167 = ssub.s32 16, 16
      %168 = vsyncadd [#allocation5], %s167
      %s170 = sshll.u32 [#allocation6], 4
      %s171 = int_to_ptr.vmem [resolvable:$true] %s170
      %173 = dma.vmem_to_hbm [thread:$0]  %s171, 16, %s4, [#allocation5]
    $region25: #{tpu_custom_call.1} parent=1 // pred_fallthru
      _
    // Predicated region
    $region26: #{tpu_custom_call.1} parent=1 // pred_check
      _
    $region27: #{tpu_custom_call.1} parent=1 // pred_check_branch
      %175 = sbr.rel (0) target = $region29
    $region28: #{tpu_custom_call.1} parent=1 // pred_region
      %s177 = ssub.s32 16, 16
      %178 = vsyncadd [#allocation8], %s177
      %s180 = sshll.u32 [#allocation7], 4
      %s181 = int_to_ptr.vmem [resolvable:$true] %s180
      %183 = dma.vmem_to_hbm [thread:$0]  %s181, 16, %s5, [#allocation8]
    $region29: #{tpu_custom_call.1} parent=1 // pred_fallthru
      _
    // Predicated region
    $region30: #{tpu_custom_call.1} parent=1 // pred_check
      _
    $region31: #{tpu_custom_call.1} parent=1 // pred_check_branch
      %185 = sbr.rel (0) target = $region33
    $region32: #{tpu_custom_call.1} parent=1 // pred_region
      %186 = dma.done [#allocation5], 16
    $region33: #{tpu_custom_call.1} parent=1 // pred_fallthru
      _
    // Predicated region
    $region34: #{tpu_custom_call.1} parent=1 // pred_check
      _
    $region35: #{tpu_custom_call.1} parent=1 // pred_check_branch
      %188 = sbr.rel (0) target = $region37
    $region36: #{tpu_custom_call.1} parent=1 // pred_region
      %189 = dma.done [#allocation8], 16
    $region37: #{tpu_custom_call.1} parent=1 // pred_fallthru
      _
    %190 = vsyncpa [#allocation4], 1
    %191 = vsyncpa [#allocation5], 1
    %192 = vsyncpa [#allocation8], 1

</llo_original>
